<compile_context>
chip_gen: v5e
topology: v5e:2x2
jax: 0.10.0
libtpu: 0.0.40
codegen_flags: <defaults>
</compile_context>

<pallas_src>
import functools

import jax
import jax.numpy as jnp
from jax.experimental import pallas as pl
from jax.experimental.pallas import tpu as pltpu


def _disc1_kernel(x_ref, w1_ref, b1_ref, w2_ref, b2_ref,
                  w3_ref, b3_ref, w4_ref, b4_ref, o_ref, flat_ref,
                  *, S, h2, slope, h4_is_reduce):
    # x_ref : (B, S, E)                 untouched module input
    # w1    : (E, h1)      b1: (1, h1)
    # w2    : (h1, h2)     b2: (1, h2)
    # w3    : (S*h2, h3)   b3: (1, h3)
    # w4    : (1, h3) if h4_is_reduce else (h3, h4);   b4: (1, h4)
    # o_ref : (B, h4)
    # flat_ref : VMEM scratch (B, S*h2) -- the "Reshape" output, assembled with
    #            lane-offset stores instead of a relayout.

    def lrelu(v):
        # LeakyReLU; maximum(v, slope*v) == where(v>0, v, slope*v) for 0<=slope<1.
        return jnp.maximum(v, slope * v)

    # Hoist weight/bias loads out of the per-position loop (vreg-resident).
    w1 = w1_ref[...]
    b1 = b1_ref[...]
    w2 = w2_ref[...]
    b2 = b2_ref[...]

    # ---- Stage 1 & 2 (token-wise MLP) fused with the (B, S*h2) reshape ----
    # Independent per-position chains: MXU pushes of position s overlap the
    # pops/VALU work of position s-1 (no serial accumulator chain).
    for s in range(S):                                      # static unroll, S small
        xs = x_ref[:, s, :]                                 # (B, E)
        hs = lrelu(jnp.dot(xs, w1, preferred_element_type=jnp.float32) + b1)
        hs = lrelu(jnp.dot(hs, w2, preferred_element_type=jnp.float32) + b2)
        flat_ref[:, s * h2:(s + 1) * h2] = hs               # cheap lane-offset store

    # ---- linear3: one (B, S*h2) @ (S*h2, h3) matmul (single MXU K pass) ----
    z = lrelu(jnp.dot(flat_ref[...], w3_ref[...],
                      preferred_element_type=jnp.float32) + b3_ref[...])   # (B, h3)

    # ---- linear4 + Sigmoid ----
    if h4_is_reduce:
        # N == 1: VPU multiply + lane reduce instead of an MXU round trip.
        y = jnp.sum(z * w4_ref[...], axis=-1, keepdims=True) + b4_ref[...]
    else:
        y = jnp.dot(z, w4_ref[...], preferred_element_type=jnp.float32) + b4_ref[...]
    o_ref[...] = jax.nn.sigmoid(y).astype(o_ref.dtype)      # (B, h4)


def discriminator1_forward(embedded_inputs, weights, params):
    """embedded_inputs: (B, S, E) float32.
    weights: dict of (in,out) matrices / (1,out) biases (PyTorch W stored transposed)."""
    B, S, E = embedded_inputs.shape
    h1, h2, h3, h4 = (params["linear1"], params["linear2"],
                      params["linear3"], params["linear4"])
    slope = float(params["leaky_relu"])
    assert params["smooth"] == "Sigmoid"
    assert 0.0 <= slope < 1.0  # required for the maximum() form of LeakyReLU

    h4_is_reduce = (h4 == 1)
    # Tiny (h3,1)->(1,h3) weight transpose; fuses under jit (activations are
    # NOT transformed on the host at all).
    w4 = weights["w4"].T if h4_is_reduce else weights["w4"]

    flops = 2 * B * S * (E * h1 + h1 * h2) + 2 * B * (S * h2 * h3 + h3 * h4)
    bytes_accessed = 4 * (B * S * E
                          + E * h1 + h1 + h1 * h2 + h2
                          + S * h2 * h3 + h3 + h3 * h4 + h4
                          + B * h4)

    vmem = pl.BlockSpec(memory_space=pltpu.MemorySpace.VMEM)
    fused = pl.pallas_call(
        functools.partial(_disc1_kernel, S=S, h2=h2, slope=slope,
                          h4_is_reduce=h4_is_reduce),
        out_shape=jax.ShapeDtypeStruct((B, h4), jnp.float32),
        in_specs=[vmem] * 9,
        out_specs=vmem,
        scratch_shapes=[pltpu.VMEM((B, S * h2), jnp.float32)],
        cost_estimate=pl.CostEstimate(flops=flops,
                                      transcendentals=B * h4,
                                      bytes_accessed=bytes_accessed),
    )
    return fused(embedded_inputs,
                 weights["w1"], weights["b1"],
                 weights["w2"], weights["b2"],
                 weights["w3"], weights["b3"],
                 w4, weights["b4"])


def _init_weights(key, B, S, E, params):
    """Deterministic synthetic init (PyTorch Linear stores weight as (out,in);
    we store the transposed (in,out) so the kernel does x @ W + b)."""
    h1, h2, h3, h4 = (params["linear1"], params["linear2"],
                      params["linear3"], params["linear4"])
    ks = jax.random.split(key, 8)

    def lin(kw, kb, fan_in, fan_out):
        bound = 1.0 / jnp.sqrt(fan_in)
        w = jax.random.uniform(kw, (fan_in, fan_out), jnp.float32, -bound, bound)
        b = jax.random.uniform(kb, (1, fan_out), jnp.float32, -bound, bound)
        return w, b

    w1, b1 = lin(ks[0], ks[1], E, h1)
    w2, b2 = lin(ks[2], ks[3], h1, h2)
    w3, b3 = lin(ks[4], ks[5], S * h2, h3)
    w4, b4 = lin(ks[6], ks[7], h3, h4)
    return dict(w1=w1, b1=b1, w2=w2, b2=b2, w3=w3, b3=b3, w4=w4, b4=b4)


if __name__ == "__main__":
    # Small shapes consistent with the module's forward.
    B, S, E = 2, 8, 32
    params = {
        "linear1": 32,
        "linear2": 16,
        "linear3": 32,
        "linear4": 1,
        "leaky_relu": 0.2,
        "smooth": "Sigmoid",
    }

    key = jax.random.PRNGKey(0)
    k_x, k_w = jax.random.split(key)
    x = jax.random.normal(k_x, (B, S, E), dtype=jnp.float32)
    weights = _init_weights(k_w, B, S, E, params)

    fwd = jax.jit(lambda xv, wv: discriminator1_forward(xv, wv, params))
    out = jax.block_until_ready(fwd(x, weights))

    # Pure-JAX reference for sanity (mirrors the PyTorch forward exactly).
    def ref(xv):
        slope = params["leaky_relu"]
        lrelu = lambda v: jnp.where(v > 0, v, slope * v)
        h = lrelu(xv @ weights["w1"] + weights["b1"])
        h = lrelu(h @ weights["w2"] + weights["b2"])
        h = h.reshape(xv.shape[0], -1)
        h = lrelu(h @ weights["w3"] + weights["b3"])
        h = h @ weights["w4"] + weights["b4"]
        return jax.nn.sigmoid(h)

    expected = ref(x)
    assert out.shape == (B, params["linear4"])
    assert jnp.allclose(out, expected, atol=1e-5, rtol=1e-5)
    print("KERNEL_OK")
</pallas_src>

<mosaic_0001>
module attributes {stable_mosaic.version = 11 : i64} {
  func.func @_disc1_kernel(%arg0: memref<2x8x32xf32, #tpu.memory_space<vmem>>, %arg1: memref<32x32xf32, #tpu.memory_space<vmem>>, %arg2: memref<1x32xf32, #tpu.memory_space<vmem>>, %arg3: memref<32x16xf32, #tpu.memory_space<vmem>>, %arg4: memref<1x16xf32, #tpu.memory_space<vmem>>, %arg5: memref<128x32xf32, #tpu.memory_space<vmem>>, %arg6: memref<1x32xf32, #tpu.memory_space<vmem>>, %arg7: memref<1x32xf32, #tpu.memory_space<vmem>>, %arg8: memref<1x1xf32, #tpu.memory_space<vmem>>, %arg9: memref<2x1xf32, #tpu.memory_space<vmem>>, %arg10: memref<2x128xf32, #tpu.memory_space<vmem>>) attributes {dimension_semantics = [], scalar_prefetch = 0 : i64, scratch_operands = 1 : i64, tpu.core_type = #tpu.core_type<tc>} {
    %c0 = arith.constant 0 : index
    %c0_0 = arith.constant 0 : index
    %0 = vector.load %arg1[%c0, %c0_0] : memref<32x32xf32, #tpu.memory_space<vmem>>, vector<32x32xf32>
    %c0_1 = arith.constant 0 : index
    %c0_2 = arith.constant 0 : index
    %1 = vector.load %arg2[%c0_1, %c0_2] : memref<1x32xf32, #tpu.memory_space<vmem>>, vector<1x32xf32>
    %c0_3 = arith.constant 0 : index
    %c0_4 = arith.constant 0 : index
    %2 = vector.load %arg3[%c0_3, %c0_4] : memref<32x16xf32, #tpu.memory_space<vmem>>, vector<32x16xf32>
    %c0_5 = arith.constant 0 : index
    %c0_6 = arith.constant 0 : index
    %3 = vector.load %arg4[%c0_5, %c0_6] : memref<1x16xf32, #tpu.memory_space<vmem>>, vector<1x16xf32>
    %c0_7 = arith.constant 0 : index
    %c0_8 = arith.constant 0 : index
    %c0_9 = arith.constant 0 : index
    %4 = vector.load %arg0[%c0_7, %c0_8, %c0_9] : memref<2x8x32xf32, #tpu.memory_space<vmem>>, vector<2x1x32xf32>
    %5 = vector.shape_cast %4 : vector<2x1x32xf32> to vector<2x32xf32>
    %cst = arith.constant dense<0.000000e+00> : vector<2x32xf32>
    %6 = tpu.matmul %5, %0, %cst {dimension_numbers = #tpu.dot_dimension_numbers<[1], [0], [0], [1], [0, 0, 1, 1], [], []>} : vector<2x32xf32>, vector<32x32xf32>, vector<2x32xf32> -> vector<2x32xf32>
    %7 = vector.broadcast %1 : vector<1x32xf32> to vector<2x32xf32>
    %8 = arith.addf %6, %7 : vector<2x32xf32>
    %cst_10 = arith.constant 2.000000e-01 : f32
    %9 = vector.broadcast %cst_10 : f32 to vector<2x32xf32>
    %10 = arith.mulf %9, %8 : vector<2x32xf32>
    %11 = arith.maximumf %8, %10 : vector<2x32xf32>
    %cst_11 = arith.constant dense<0.000000e+00> : vector<2x16xf32>
    %12 = tpu.matmul %11, %2, %cst_11 {dimension_numbers = #tpu.dot_dimension_numbers<[1], [0], [0], [1], [0, 0, 1, 1], [], []>} : vector<2x32xf32>, vector<32x16xf32>, vector<2x16xf32> -> vector<2x16xf32>
    %13 = vector.broadcast %3 : vector<1x16xf32> to vector<2x16xf32>
    %14 = arith.addf %12, %13 : vector<2x16xf32>
    %cst_12 = arith.constant 2.000000e-01 : f32
    %15 = vector.broadcast %cst_12 : f32 to vector<2x16xf32>
    %16 = arith.mulf %15, %14 : vector<2x16xf32>
    %17 = arith.maximumf %14, %16 : vector<2x16xf32>
    %c0_13 = arith.constant 0 : index
    %c0_14 = arith.constant 0 : index
    %18 = vector.load %arg10[%c0_13, %c0_14] : memref<2x128xf32, #tpu.memory_space<vmem>>, vector<2x16xf32>
    tpu.vector_store %arg10[%c0_13, %c0_14], %17 {strides = array<i32>} : memref<2x128xf32, #tpu.memory_space<vmem>>, vector<2x16xf32>,
    %c0_15 = arith.constant 0 : index
    %c1 = arith.constant 1 : index
    %c0_16 = arith.constant 0 : index
    %19 = vector.load %arg0[%c0_15, %c1, %c0_16] : memref<2x8x32xf32, #tpu.memory_space<vmem>>, vector<2x1x32xf32>
    %20 = vector.shape_cast %19 : vector<2x1x32xf32> to vector<2x32xf32>
    %cst_17 = arith.constant dense<0.000000e+00> : vector<2x32xf32>
    %21 = tpu.matmul %20, %0, %cst_17 {dimension_numbers = #tpu.dot_dimension_numbers<[1], [0], [0], [1], [0, 0, 1, 1], [], []>} : vector<2x32xf32>, vector<32x32xf32>, vector<2x32xf32> -> vector<2x32xf32>
    %22 = vector.broadcast %1 : vector<1x32xf32> to vector<2x32xf32>
    %23 = arith.addf %21, %22 : vector<2x32xf32>
    %cst_18 = arith.constant 2.000000e-01 : f32
    %24 = vector.broadcast %cst_18 : f32 to vector<2x32xf32>
    %25 = arith.mulf %24, %23 : vector<2x32xf32>
    %26 = arith.maximumf %23, %25 : vector<2x32xf32>
    %cst_19 = arith.constant dense<0.000000e+00> : vector<2x16xf32>
    %27 = tpu.matmul %26, %2, %cst_19 {dimension_numbers = #tpu.dot_dimension_numbers<[1], [0], [0], [1], [0, 0, 1, 1], [], []>} : vector<2x32xf32>, vector<32x16xf32>, vector<2x16xf32> -> vector<2x16xf32>
    %28 = vector.broadcast %3 : vector<1x16xf32> to vector<2x16xf32>
    %29 = arith.addf %27, %28 : vector<2x16xf32>
    %cst_20 = arith.constant 2.000000e-01 : f32
    %30 = vector.broadcast %cst_20 : f32 to vector<2x16xf32>
    %31 = arith.mulf %30, %29 : vector<2x16xf32>
    %32 = arith.maximumf %29, %31 : vector<2x16xf32>
    %c0_21 = arith.constant 0 : index
    %c16 = arith.constant 16 : index
    %33 = vector.load %arg10[%c0_21, %c16] : memref<2x128xf32, #tpu.memory_space<vmem>>, vector<2x16xf32>
    tpu.vector_store %arg10[%c0_21, %c16], %32 {strides = array<i32>} : memref<2x128xf32, #tpu.memory_space<vmem>>, vector<2x16xf32>,
    %c0_22 = arith.constant 0 : index
    %c2 = arith.constant 2 : index
    %c0_23 = arith.constant 0 : index
    %34 = vector.load %arg0[%c0_22, %c2, %c0_23] : memref<2x8x32xf32, #tpu.memory_space<vmem>>, vector<2x1x32xf32>
    %35 = vector.shape_cast %34 : vector<2x1x32xf32> to vector<2x32xf32>
    %cst_24 = arith.constant dense<0.000000e+00> : vector<2x32xf32>
    %36 = tpu.matmul %35, %0, %cst_24 {dimension_numbers = #tpu.dot_dimension_numbers<[1], [0], [0], [1], [0, 0, 1, 1], [], []>} : vector<2x32xf32>, vector<32x32xf32>, vector<2x32xf32> -> vector<2x32xf32>
    %37 = vector.broadcast %1 : vector<1x32xf32> to vector<2x32xf32>
    %38 = arith.addf %36, %37 : vector<2x32xf32>
    %cst_25 = arith.constant 2.000000e-01 : f32
    %39 = vector.broadcast %cst_25 : f32 to vector<2x32xf32>
    %40 = arith.mulf %39, %38 : vector<2x32xf32>
    %41 = arith.maximumf %38, %40 : vector<2x32xf32>
    %cst_26 = arith.constant dense<0.000000e+00> : vector<2x16xf32>
    %42 = tpu.matmul %41, %2, %cst_26 {dimension_numbers = #tpu.dot_dimension_numbers<[1], [0], [0], [1], [0, 0, 1, 1], [], []>} : vector<2x32xf32>, vector<32x16xf32>, vector<2x16xf32> -> vector<2x16xf32>
    %43 = vector.broadcast %3 : vector<1x16xf32> to vector<2x16xf32>
    %44 = arith.addf %42, %43 : vector<2x16xf32>
    %cst_27 = arith.constant 2.000000e-01 : f32
    %45 = vector.broadcast %cst_27 : f32 to vector<2x16xf32>
    %46 = arith.mulf %45, %44 : vector<2x16xf32>
    %47 = arith.maximumf %44, %46 : vector<2x16xf32>
    %c0_28 = arith.constant 0 : index
    %c32 = arith.constant 32 : index
    %48 = vector.load %arg10[%c0_28, %c32] : memref<2x128xf32, #tpu.memory_space<vmem>>, vector<2x16xf32>
    tpu.vector_store %arg10[%c0_28, %c32], %47 {strides = array<i32>} : memref<2x128xf32, #tpu.memory_space<vmem>>, vector<2x16xf32>,
    %c0_29 = arith.constant 0 : index
    %c3 = arith.constant 3 : index
    %c0_30 = arith.constant 0 : index
    %49 = vector.load %arg0[%c0_29, %c3, %c0_30] : memref<2x8x32xf32, #tpu.memory_space<vmem>>, vector<2x1x32xf32>
    %50 = vector.shape_cast %49 : vector<2x1x32xf32> to vector<2x32xf32>
    %cst_31 = arith.constant dense<0.000000e+00> : vector<2x32xf32>
    %51 = tpu.matmul %50, %0, %cst_31 {dimension_numbers = #tpu.dot_dimension_numbers<[1], [0], [0], [1], [0, 0, 1, 1], [], []>} : vector<2x32xf32>, vector<32x32xf32>, vector<2x32xf32> -> vector<2x32xf32>
    %52 = vector.broadcast %1 : vector<1x32xf32> to vector<2x32xf32>
    %53 = arith.addf %51, %52 : vector<2x32xf32>
    %cst_32 = arith.constant 2.000000e-01 : f32
    %54 = vector.broadcast %cst_32 : f32 to vector<2x32xf32>
    %55 = arith.mulf %54, %53 : vector<2x32xf32>
    %56 = arith.maximumf %53, %55 : vector<2x32xf32>
    %cst_33 = arith.constant dense<0.000000e+00> : vector<2x16xf32>
    %57 = tpu.matmul %56, %2, %cst_33 {dimension_numbers = #tpu.dot_dimension_numbers<[1], [0], [0], [1], [0, 0, 1, 1], [], []>} : vector<2x32xf32>, vector<32x16xf32>, vector<2x16xf32> -> vector<2x16xf32>
    %58 = vector.broadcast %3 : vector<1x16xf32> to vector<2x16xf32>
    %59 = arith.addf %57, %58 : vector<2x16xf32>
    %cst_34 = arith.constant 2.000000e-01 : f32
    %60 = vector.broadcast %cst_34 : f32 to vector<2x16xf32>
    %61 = arith.mulf %60, %59 : vector<2x16xf32>
    %62 = arith.maximumf %59, %61 : vector<2x16xf32>
    %c0_35 = arith.constant 0 : index
    %c48 = arith.constant 48 : index
    %63 = vector.load %arg10[%c0_35, %c48] : memref<2x128xf32, #tpu.memory_space<vmem>>, vector<2x16xf32>
    tpu.vector_store %arg10[%c0_35, %c48], %62 {strides = array<i32>} : memref<2x128xf32, #tpu.memory_space<vmem>>, vector<2x16xf32>,
    %c0_36 = arith.constant 0 : index
    %c4 = arith.constant 4 : index
    %c0_37 = arith.constant 0 : index
    %64 = vector.load %arg0[%c0_36, %c4, %c0_37] : memref<2x8x32xf32, #tpu.memory_space<vmem>>, vector<2x1x32xf32>
    %65 = vector.shape_cast %64 : vector<2x1x32xf32> to vector<2x32xf32>
    %cst_38 = arith.constant dense<0.000000e+00> : vector<2x32xf32>
    %66 = tpu.matmul %65, %0, %cst_38 {dimension_numbers = #tpu.dot_dimension_numbers<[1], [0], [0], [1], [0, 0, 1, 1], [], []>} : vector<2x32xf32>, vector<32x32xf32>, vector<2x32xf32> -> vector<2x32xf32>
    %67 = vector.broadcast %1 : vector<1x32xf32> to vector<2x32xf32>
    %68 = arith.addf %66, %67 : vector<2x32xf32>
    %cst_39 = arith.constant 2.000000e-01 : f32
    %69 = vector.broadcast %cst_39 : f32 to vector<2x32xf32>
    %70 = arith.mulf %69, %68 : vector<2x32xf32>
    %71 = arith.maximumf %68, %70 : vector<2x32xf32>
    %cst_40 = arith.constant dense<0.000000e+00> : vector<2x16xf32>
    %72 = tpu.matmul %71, %2, %cst_40 {dimension_numbers = #tpu.dot_dimension_numbers<[1], [0], [0], [1], [0, 0, 1, 1], [], []>} : vector<2x32xf32>, vector<32x16xf32>, vector<2x16xf32> -> vector<2x16xf32>
    %73 = vector.broadcast %3 : vector<1x16xf32> to vector<2x16xf32>
    %74 = arith.addf %72, %73 : vector<2x16xf32>
    %cst_41 = arith.constant 2.000000e-01 : f32
    %75 = vector.broadcast %cst_41 : f32 to vector<2x16xf32>
    %76 = arith.mulf %75, %74 : vector<2x16xf32>
    %77 = arith.maximumf %74, %76 : vector<2x16xf32>
    %c0_42 = arith.constant 0 : index
    %c64 = arith.constant 64 : index
    %78 = vector.load %arg10[%c0_42, %c64] : memref<2x128xf32, #tpu.memory_space<vmem>>, vector<2x16xf32>
    tpu.vector_store %arg10[%c0_42, %c64], %77 {strides = array<i32>} : memref<2x128xf32, #tpu.memory_space<vmem>>, vector<2x16xf32>,
    %c0_43 = arith.constant 0 : index
    %c5 = arith.constant 5 : index
    %c0_44 = arith.constant 0 : index
    %79 = vector.load %arg0[%c0_43, %c5, %c0_44] : memref<2x8x32xf32, #tpu.memory_space<vmem>>, vector<2x1x32xf32>
    %80 = vector.shape_cast %79 : vector<2x1x32xf32> to vector<2x32xf32>
    %cst_45 = arith.constant dense<0.000000e+00> : vector<2x32xf32>
    %81 = tpu.matmul %80, %0, %cst_45 {dimension_numbers = #tpu.dot_dimension_numbers<[1], [0], [0], [1], [0, 0, 1, 1], [], []>} : vector<2x32xf32>, vector<32x32xf32>, vector<2x32xf32> -> vector<2x32xf32>
    %82 = vector.broadcast %1 : vector<1x32xf32> to vector<2x32xf32>
    %83 = arith.addf %81, %82 : vector<2x32xf32>
    %cst_46 = arith.constant 2.000000e-01 : f32
    %84 = vector.broadcast %cst_46 : f32 to vector<2x32xf32>
    %85 = arith.mulf %84, %83 : vector<2x32xf32>
    %86 = arith.maximumf %83, %85 : vector<2x32xf32>
    %cst_47 = arith.constant dense<0.000000e+00> : vector<2x16xf32>
    %87 = tpu.matmul %86, %2, %cst_47 {dimension_numbers = #tpu.dot_dimension_numbers<[1], [0], [0], [1], [0, 0, 1, 1], [], []>} : vector<2x32xf32>, vector<32x16xf32>, vector<2x16xf32> -> vector<2x16xf32>
    %88 = vector.broadcast %3 : vector<1x16xf32> to vector<2x16xf32>
    %89 = arith.addf %87, %88 : vector<2x16xf32>
    %cst_48 = arith.constant 2.000000e-01 : f32
    %90 = vector.broadcast %cst_48 : f32 to vector<2x16xf32>
    %91 = arith.mulf %90, %89 : vector<2x16xf32>
    %92 = arith.maximumf %89, %91 : vector<2x16xf32>
    %c0_49 = arith.constant 0 : index
    %c80 = arith.constant 80 : index
    %93 = vector.load %arg10[%c0_49, %c80] : memref<2x128xf32, #tpu.memory_space<vmem>>, vector<2x16xf32>
    tpu.vector_store %arg10[%c0_49, %c80], %92 {strides = array<i32>} : memref<2x128xf32, #tpu.memory_space<vmem>>, vector<2x16xf32>,
    %c0_50 = arith.constant 0 : index
    %c6 = arith.constant 6 : index
    %c0_51 = arith.constant 0 : index
    %94 = vector.load %arg0[%c0_50, %c6, %c0_51] : memref<2x8x32xf32, #tpu.memory_space<vmem>>, vector<2x1x32xf32>
    %95 = vector.shape_cast %94 : vector<2x1x32xf32> to vector<2x32xf32>
    %cst_52 = arith.constant dense<0.000000e+00> : vector<2x32xf32>
    %96 = tpu.matmul %95, %0, %cst_52 {dimension_numbers = #tpu.dot_dimension_numbers<[1], [0], [0], [1], [0, 0, 1, 1], [], []>} : vector<2x32xf32>, vector<32x32xf32>, vector<2x32xf32> -> vector<2x32xf32>
    %97 = vector.broadcast %1 : vector<1x32xf32> to vector<2x32xf32>
    %98 = arith.addf %96, %97 : vector<2x32xf32>
    %cst_53 = arith.constant 2.000000e-01 : f32
    %99 = vector.broadcast %cst_53 : f32 to vector<2x32xf32>
    %100 = arith.mulf %99, %98 : vector<2x32xf32>
    %101 = arith.maximumf %98, %100 : vector<2x32xf32>
    %cst_54 = arith.constant dense<0.000000e+00> : vector<2x16xf32>
    %102 = tpu.matmul %101, %2, %cst_54 {dimension_numbers = #tpu.dot_dimension_numbers<[1], [0], [0], [1], [0, 0, 1, 1], [], []>} : vector<2x32xf32>, vector<32x16xf32>, vector<2x16xf32> -> vector<2x16xf32>
    %103 = vector.broadcast %3 : vector<1x16xf32> to vector<2x16xf32>
    %104 = arith.addf %102, %103 : vector<2x16xf32>
    %cst_55 = arith.constant 2.000000e-01 : f32
    %105 = vector.broadcast %cst_55 : f32 to vector<2x16xf32>
    %106 = arith.mulf %105, %104 : vector<2x16xf32>
    %107 = arith.maximumf %104, %106 : vector<2x16xf32>
    %c0_56 = arith.constant 0 : index
    %c96 = arith.constant 96 : index
    %108 = vector.load %arg10[%c0_56, %c96] : memref<2x128xf32, #tpu.memory_space<vmem>>, vector<2x16xf32>
    tpu.vector_store %arg10[%c0_56, %c96], %107 {strides = array<i32>} : memref<2x128xf32, #tpu.memory_space<vmem>>, vector<2x16xf32>,
    %c0_57 = arith.constant 0 : index
    %c7 = arith.constant 7 : index
    %c0_58 = arith.constant 0 : index
    %109 = vector.load %arg0[%c0_57, %c7, %c0_58] : memref<2x8x32xf32, #tpu.memory_space<vmem>>, vector<2x1x32xf32>
    %110 = vector.shape_cast %109 : vector<2x1x32xf32> to vector<2x32xf32>
    %cst_59 = arith.constant dense<0.000000e+00> : vector<2x32xf32>
    %111 = tpu.matmul %110, %0, %cst_59 {dimension_numbers = #tpu.dot_dimension_numbers<[1], [0], [0], [1], [0, 0, 1, 1], [], []>} : vector<2x32xf32>, vector<32x32xf32>, vector<2x32xf32> -> vector<2x32xf32>
    %112 = vector.broadcast %1 : vector<1x32xf32> to vector<2x32xf32>
    %113 = arith.addf %111, %112 : vector<2x32xf32>
    %cst_60 = arith.constant 2.000000e-01 : f32
    %114 = vector.broadcast %cst_60 : f32 to vector<2x32xf32>
    %115 = arith.mulf %114, %113 : vector<2x32xf32>
    %116 = arith.maximumf %113, %115 : vector<2x32xf32>
    %cst_61 = arith.constant dense<0.000000e+00> : vector<2x16xf32>
    %117 = tpu.matmul %116, %2, %cst_61 {dimension_numbers = #tpu.dot_dimension_numbers<[1], [0], [0], [1], [0, 0, 1, 1], [], []>} : vector<2x32xf32>, vector<32x16xf32>, vector<2x16xf32> -> vector<2x16xf32>
    %118 = vector.broadcast %3 : vector<1x16xf32> to vector<2x16xf32>
    %119 = arith.addf %117, %118 : vector<2x16xf32>
    %cst_62 = arith.constant 2.000000e-01 : f32
    %120 = vector.broadcast %cst_62 : f32 to vector<2x16xf32>
    %121 = arith.mulf %120, %119 : vector<2x16xf32>
    %122 = arith.maximumf %119, %121 : vector<2x16xf32>
    %c0_63 = arith.constant 0 : index
    %c112 = arith.constant 112 : index
    %123 = vector.load %arg10[%c0_63, %c112] : memref<2x128xf32, #tpu.memory_space<vmem>>, vector<2x16xf32>
    tpu.vector_store %arg10[%c0_63, %c112], %122 {strides = array<i32>} : memref<2x128xf32, #tpu.memory_space<vmem>>, vector<2x16xf32>,
    %c0_64 = arith.constant 0 : index
    %c0_65 = arith.constant 0 : index
    %124 = vector.load %arg10[%c0_64, %c0_65] : memref<2x128xf32, #tpu.memory_space<vmem>>, vector<2x128xf32>
    %c0_66 = arith.constant 0 : index
    %c0_67 = arith.constant 0 : index
    %125 = vector.load %arg5[%c0_66, %c0_67] : memref<128x32xf32, #tpu.memory_space<vmem>>, vector<128x32xf32>
    %cst_68 = arith.constant dense<0.000000e+00> : vector<2x32xf32>
    %126 = tpu.matmul %124, %125, %cst_68 {dimension_numbers = #tpu.dot_dimension_numbers<[1], [0], [0], [1], [0, 0, 1, 1], [], []>} : vector<2x128xf32>, vector<128x32xf32>, vector<2x32xf32> -> vector<2x32xf32>
    %c0_69 = arith.constant 0 : index
    %c0_70 = arith.constant 0 : index
    %127 = vector.load %arg6[%c0_69, %c0_70] : memref<1x32xf32, #tpu.memory_space<vmem>>, vector<1x32xf32>
    %128 = vector.broadcast %127 : vector<1x32xf32> to vector<2x32xf32>
    %129 = arith.addf %126, %128 : vector<2x32xf32>
    %cst_71 = arith.constant 2.000000e-01 : f32
    %130 = vector.broadcast %cst_71 : f32 to vector<2x32xf32>
    %131 = arith.mulf %130, %129 : vector<2x32xf32>
    %132 = arith.maximumf %129, %131 : vector<2x32xf32>
    %c0_72 = arith.constant 0 : index
    %c0_73 = arith.constant 0 : index
    %133 = vector.load %arg7[%c0_72, %c0_73] : memref<1x32xf32, #tpu.memory_space<vmem>>, vector<1x32xf32>
    %134 = vector.broadcast %133 : vector<1x32xf32> to vector<2x32xf32>
    %135 = arith.mulf %132, %134 : vector<2x32xf32>
    %cst_74 = arith.constant dense<0.000000e+00> : vector<2xf32>
    %136 = vector.multi_reduction <add>, %135, %cst_74 [1] : vector<2x32xf32> to vector<2xf32>
    %137 = vector.shape_cast %136 : vector<2xf32> to vector<2x1xf32>
    %c0_75 = arith.constant 0 : index
    %c0_76 = arith.constant 0 : index
    %138 = vector.load %arg8[%c0_75, %c0_76] : memref<1x1xf32, #tpu.memory_space<vmem>>, vector<1x1xf32>
    %139 = vector.broadcast %138 : vector<1x1xf32> to vector<2x1xf32>
    %140 = arith.addf %137, %139 : vector<2x1xf32>
    %141 = arith.negf %140 : vector<2x1xf32>
    %142 = math.exp %141 : vector<2x1xf32>
    %cst_77 = arith.constant 1.000000e+00 : f32
    %143 = vector.broadcast %cst_77 : f32 to vector<2x1xf32>
    %144 = arith.addf %143, %142 : vector<2x1xf32>
    %145 = arith.divf %143, %144 : vector<2x1xf32>
    %c0_78 = arith.constant 0 : index
    %c0_79 = arith.constant 0 : index
    %146 = vector.load %arg9[%c0_78, %c0_79] : memref<2x1xf32, #tpu.memory_space<vmem>>, vector<2x1xf32>
    tpu.vector_store %arg9[%c0_78, %c0_79], %145 {strides = array<i32>} : memref<2x1xf32, #tpu.memory_space<vmem>>, vector<2x1xf32>,
    return
  }
}

</mosaic_0001>

<llo_original>
// kernel: _lambda_.1
$region0: #{_lambda_.1}
  #allocation0 [shape = 'u32[]', space=smem, size = 0x4, offset = 0x4, fixed_abs, tag = 'smem constant byte address 0x4 - core index']
  #allocation1 [shape = 'u32[72,128]{1,0:T(1,128)}', space=vmem, size = 0x9000, scoped, tag = 'internal scratch']
  #allocation2 [shape = 'f32[2,128]{1,0:T(2,128)}', space=vmem, size = 0x400, scoped, tag = 'scratch operand']
  #allocation3 [shape = 'f32[1,1]{1,0:T(1,128)S(1)}', space=vmem, size = 0x200, scoped, tag = 'scoped memory for _lambda_.1']
  %s0 = inlined_call_operand.vmem [shape: f32[2,8,32], index: 0, kind: input, shape index: {}]
  %s1 = inlined_call_operand.vmem [shape: f32[32,32], index: 1, kind: input, shape index: {}]
  %s2 = inlined_call_operand.vmem [shape: f32[1,32], index: 2, kind: input, shape index: {}]
  %s3 = inlined_call_operand.vmem [shape: f32[32,16], index: 3, kind: input, shape index: {}]
  %s4 = inlined_call_operand.vmem [shape: f32[1,16], index: 4, kind: input, shape index: {}]
  %s5 = inlined_call_operand.vmem [shape: f32[128,32], index: 5, kind: input, shape index: {}]
  %s6 = inlined_call_operand.vmem [shape: f32[1,32], index: 6, kind: input, shape index: {}]
  %s7 = inlined_call_operand.vmem [shape: f32[1,32], index: 7, kind: input, shape index: {}]
  %s8 = inlined_call_operand.<no memory space> [shape: f32[1,1], index: 8, kind: input, shape index: {}]
  %s9 = inlined_call_operand.vmem [shape: f32[2,1], index: 9, kind: output, shape index: {}]
  %s10 = sld [smem:[#allocation0]]
  $region46: #{_lambda_.1} parent=0
    _
  %s12 = ssub.s32 1, %s10
  %s13 = scalar_select 0, %s12, %s10
  %v14 = vstv %s8
  %15 = vst [vmem:[#allocation3] sm:$0x1] %v14
  // Predicated region
  $region2: #{_lambda_.1} parent=0 // pred_check
    _
  $region3: #{_lambda_.1} parent=0 // pred_check_branch
    %17 = sbr.rel (0) target = $region5
  $region4: #{_lambda_.1} parent=0 // pred_region
    _
  $region5: #{_lambda_.1} parent=0 // pred_fallthru
    _
  // Predicated region
  $region6: #{_lambda_.1} parent=0 // pred_check
    _
  $region7: #{_lambda_.1} parent=0 // pred_check_branch
    %19 = sbr.rel (0) target = $region9
  $region8: #{_lambda_.1} parent=0 // pred_region
    _
  $region9: #{_lambda_.1} parent=0 // pred_fallthru
    _
  // Predicated region
  $region10: #{_lambda_.1} parent=0 // pred_check
    _
  $region11: #{_lambda_.1} parent=0 // pred_check_branch
    %21 = sbr.rel (0) target = $region13
  $region12: #{_lambda_.1} parent=0 // pred_region
    _
  $region13: #{_lambda_.1} parent=0 // pred_fallthru
    _
  // Predicated region
  $region14: #{_lambda_.1} parent=0 // pred_check
    _
  $region15: #{_lambda_.1} parent=0 // pred_check_branch
    %23 = sbr.rel (0) target = $region17
  $region16: #{_lambda_.1} parent=0 // pred_region
    _
  $region17: #{_lambda_.1} parent=0 // pred_fallthru
    _
  // Predicated region
  $region18: #{_lambda_.1} parent=0 // pred_check
    _
  $region19: #{_lambda_.1} parent=0 // pred_check_branch
    %25 = sbr.rel (0) target = $region21
  $region20: #{_lambda_.1} parent=0 // pred_region
    _
  $region21: #{_lambda_.1} parent=0 // pred_fallthru
    _
  // Predicated region
  $region22: #{_lambda_.1} parent=0 // pred_check
    _
  $region23: #{_lambda_.1} parent=0 // pred_check_branch
    %27 = sbr.rel (0) target = $region25
  $region24: #{_lambda_.1} parent=0 // pred_region
    _
  $region25: #{_lambda_.1} parent=0 // pred_fallthru
    _
  // Predicated region
  $region26: #{_lambda_.1} parent=0 // pred_check
    _
  $region27: #{_lambda_.1} parent=0 // pred_check_branch
    %29 = sbr.rel (0) target = $region29
  $region28: #{_lambda_.1} parent=0 // pred_region
    _
  $region29: #{_lambda_.1} parent=0 // pred_fallthru
    _
  // Predicated region
  $region30: #{_lambda_.1} parent=0 // pred_check
    _
  $region31: #{_lambda_.1} parent=0 // pred_check_branch
    %31 = sbr.rel (0) target = $region33
  $region32: #{_lambda_.1} parent=0 // pred_region
    _
  $region33: #{_lambda_.1} parent=0 // pred_fallthru
    _
  // Predicated region
  $region34: #{_lambda_.1} parent=0 // pred_check
    _
  $region35: #{_lambda_.1} parent=0 // pred_check_branch
    %33 = sbr.rel (0) target = $region37
  $region36: #{_lambda_.1} parent=0 // pred_region
    _
  $region37: #{_lambda_.1} parent=0 // pred_fallthru
    _
  %v34 = vld [vmem:[%s1] sm:$0xff]
  %v35 = vld [vmem:[%s1 + $0x8] sm:$0xff]
  %v36 = vld [vmem:[%s1 + $0x10] sm:$0xff]
  %v37 = vld [vmem:[%s1 + $0x18] sm:$0xff]
  %v38 = vld [vmem:[%s2] sm:$0x1]
  %v39 = vld [vmem:[%s3] sm:$0xff]
  %v40 = vld [vmem:[%s3 + $0x8] sm:$0xff]
  %v41 = vld [vmem:[%s3 + $0x10] sm:$0xff]
  %v42 = vld [vmem:[%s3 + $0x18] sm:$0xff]
  %v43 = vld [vmem:[%s4] sm:$0x1]
  %v44 = vld [vmem:[%s0] sm:$0x1]
  %v45 = vld [vmem:[%s0 + $0x8] sm:$0x1]
  %v47 = vperm.slane %v38, 0
  %v51 = vrot.slane %v45, 7
  %vm52 = vcmask 1041409
  %v53 = vsel %vm52, %v51, %v44
  %vm54 = vcmask 261120
  %v55 = vsel %vm54, %v53, 0
  %57 = vmatpush.msra.mxu0 0.0
  %58 = vmatpush.msra.mxu0 0.0
  %59 = vmatpush.msra.mxu0 0.0
  %60 = vmatpush.msra.mxu0 0.0
  %61 = vmatpush.msra.mxu0 0.0
  %62 = vmatpush.msra.mxu0 0.0
  %63 = vmatpush.msra.mxu0 0.0
  %64 = vmatpush.msra.mxu0 0.0
  %65 = vmatpush.msra.mxu0 0.0
  %66 = vmatpush.msra.mxu0 0.0
  %67 = vmatpush.msra.mxu0 0.0
  %68 = vmatpush.msra.mxu0 0.0
  %69 = vmatpush.msra.mxu0 %v37
  %70 = vmatpush.msra.mxu0 %v36
  %71 = vmatpush.msra.mxu0 %v35
  %72 = vmatpush.msra.mxu0 %v34
  %73 = vmatmul.f32.gmra.mxu0 %v55
  %v74 = vpop.f32.mrf.mxu0
  %v75 = vadd.f32 %v47, %v74
  %76 = vdwg.mxu0
  %v77 = vmul.f32 %v75, 0.2
  %v78 = vmax.f32 %v75, %v77
  %v80 = vperm.slane %v43, 0
  %v83 = vsel %vm54, %v78, 0
  %85 = vmatpush.msra.mxu0 0.0
  %86 = vmatpush.msra.mxu0 0.0
  %87 = vmatpush.msra.mxu0 0.0
  %88 = vmatpush.msra.mxu0 0.0
  %89 = vmatpush.msra.mxu0 0.0
  %90 = vmatpush.msra.mxu0 0.0
  %91 = vmatpush.msra.mxu0 0.0
  %92 = vmatpush.msra.mxu0 0.0
  %93 = vmatpush.msra.mxu0 0.0
  %94 = vmatpush.msra.mxu0 0.0
  %95 = vmatpush.msra.mxu0 0.0
  %96 = vmatpush.msra.mxu0 0.0
  %97 = vmatpush.msra.mxu0 %v42
  %98 = vmatpush.msra.mxu0 %v41
  %99 = vmatpush.msra.mxu0 %v40
  %100 = vmatpush.msra.mxu0 %v39
  %101 = vmatmul.f32.gmra.mxu0 %v83
  %v102 = vpop.f32.mrf.mxu0
  %v103 = vadd.f32 %v80, %v102
  %104 = vdwg.mxu0
  %v105 = vmul.f32 %v103, 0.2
  %v106 = vmax.f32 %v103, %v105
  %vm107 = vcmask 123904
  %108 = vst.msk [vmem:[#allocation2] sm:$0x3] %vm107, %v106
  %v109 = vld [vmem:[%s0 + $0x1] sm:$0x1]
  %v110 = vld [vmem:[%s0 + $0x9] sm:$0x1]
  %v113 = vrot.slane %v110, 7
  %v114 = vsel %vm52, %v113, %v109
  %v115 = vsel %vm54, %v114, 0
  %117 = vmatpush.msra.mxu0 0.0
  %118 = vmatpush.msra.mxu0 0.0
  %119 = vmatpush.msra.mxu0 0.0
  %120 = vmatpush.msra.mxu0 0.0
  %121 = vmatpush.msra.mxu0 0.0
  %122 = vmatpush.msra.mxu0 0.0
  %123 = vmatpush.msra.mxu0 0.0
  %124 = vmatpush.msra.mxu0 0.0
  %125 = vmatpush.msra.mxu0 0.0
  %126 = vmatpush.msra.mxu0 0.0
  %127 = vmatpush.msra.mxu0 0.0
  %128 = vmatpush.msra.mxu0 0.0
  %129 = vmatpush.msra.mxu0 %v37
  %130 = vmatpush.msra.mxu0 %v36
  %131 = vmatpush.msra.mxu0 %v35
  %132 = vmatpush.msra.mxu0 %v34
  %133 = vmatmul.f32.gmra.mxu0 %v115
  %v134 = vpop.f32.mrf.mxu0
  %v135 = vadd.f32 %v47, %v134
  %136 = vdwg.mxu0
  %v137 = vmul.f32 %v135, 0.2
  %v138 = vmax.f32 %v135, %v137
  %v140 = vsel %vm54, %v138, 0
  %142 = vmatpush.msra.mxu0 0.0
  %143 = vmatpush.msra.mxu0 0.0
  %144 = vmatpush.msra.mxu0 0.0
  %145 = vmatpush.msra.mxu0 0.0
  %146 = vmatpush.msra.mxu0 0.0
  %147 = vmatpush.msra.mxu0 0.0
  %148 = vmatpush.msra.mxu0 0.0
  %149 = vmatpush.msra.mxu0 0.0
  %150 = vmatpush.msra.mxu0 0.0
  %151 = vmatpush.msra.mxu0 0.0
  %152 = vmatpush.msra.mxu0 0.0
  %153 = vmatpush.msra.mxu0 0.0
  %154 = vmatpush.msra.mxu0 %v42
  %155 = vmatpush.msra.mxu0 %v41
  %156 = vmatpush.msra.mxu0 %v40
  %157 = vmatpush.msra.mxu0 %v39
  %158 = vmatmul.f32.gmra.mxu0 %v140
  %v159 = vpop.f32.mrf.mxu0
  %v160 = vadd.f32 %v80, %v159
  %161 = vdwg.mxu0
  %v162 = vmul.f32 %v160, 0.2
  %v163 = vmax.f32 %v160, %v162
  %165 = vrot.lane.b32.xlu0 %v163, 16
  %v166 = vpop.permute.xlu0 %165
  %vm168 = vcmask 255104
  %169 = vst.msk [vmem:[#allocation2] sm:$0x3] %vm168, %v166
  %v170 = vld [vmem:[%s0 + $0x2] sm:$0x1]
  %v171 = vld [vmem:[%s0 + $0xa] sm:$0x1]
  %v174 = vrot.slane %v171, 7
  %v175 = vsel %vm52, %v174, %v170
  %v176 = vsel %vm54, %v175, 0
  %178 = vmatpush.msra.mxu0 0.0
  %179 = vmatpush.msra.mxu0 0.0
  %180 = vmatpush.msra.mxu0 0.0
  %181 = vmatpush.msra.mxu0 0.0
  %182 = vmatpush.msra.mxu0 0.0
  %183 = vmatpush.msra.mxu0 0.0
  %184 = vmatpush.msra.mxu0 0.0
  %185 = vmatpush.msra.mxu0 0.0
  %186 = vmatpush.msra.mxu0 0.0
  %187 = vmatpush.msra.mxu0 0.0
  %188 = vmatpush.msra.mxu0 0.0
  %189 = vmatpush.msra.mxu0 0.0
  %190 = vmatpush.msra.mxu0 %v37
  %191 = vmatpush.msra.mxu0 %v36
  %192 = vmatpush.msra.mxu0 %v35
  %193 = vmatpush.msra.mxu0 %v34
  %194 = vmatmul.f32.gmra.mxu0 %v176
  %v195 = vpop.f32.mrf.mxu0
  %v196 = vadd.f32 %v47, %v195
  %197 = vdwg.mxu0
  %v198 = vmul.f32 %v196, 0.2
  %v199 = vmax.f32 %v196, %v198
  %v201 = vsel %vm54, %v199, 0
  %203 = vmatpush.msra.mxu0 0.0
  %204 = vmatpush.msra.mxu0 0.0
  %205 = vmatpush.msra.mxu0 0.0
  %206 = vmatpush.msra.mxu0 0.0
  %207 = vmatpush.msra.mxu0 0.0
  %208 = vmatpush.msra.mxu0 0.0
  %209 = vmatpush.msra.mxu0 0.0
  %210 = vmatpush.msra.mxu0 0.0
  %211 = vmatpush.msra.mxu0 0.0
  %212 = vmatpush.msra.mxu0 0.0
  %213 = vmatpush.msra.mxu0 0.0
  %214 = vmatpush.msra.mxu0 0.0
  %215 = vmatpush.msra.mxu0 %v42
  %216 = vmatpush.msra.mxu0 %v41
  %217 = vmatpush.msra.mxu0 %v40
  %218 = vmatpush.msra.mxu0 %v39
  %219 = vmatmul.f32.gmra.mxu0 %v201
  %v220 = vpop.f32.mrf.mxu0
  %v221 = vadd.f32 %v80, %v220
  %222 = vdwg.mxu0
  %v223 = vmul.f32 %v221, 0.2
  %v224 = vmax.f32 %v221, %v223
  %226 = vrot.lane.b32.xlu0 %v224, 32
  %v227 = vpop.permute.xlu0 %226
  %vm229 = vcmask 386304
  %230 = vst.msk [vmem:[#allocation2] sm:$0x3] %vm229, %v227
  %v231 = vld [vmem:[%s0 + $0x3] sm:$0x1]
  %v232 = vld [vmem:[%s0 + $0xb] sm:$0x1]
  %v235 = vrot.slane %v232, 7
  %v236 = vsel %vm52, %v235, %v231
  %v237 = vsel %vm54, %v236, 0
  %239 = vmatpush.msra.mxu0 0.0
  %240 = vmatpush.msra.mxu0 0.0
  %241 = vmatpush.msra.mxu0 0.0
  %242 = vmatpush.msra.mxu0 0.0
  %243 = vmatpush.msra.mxu0 0.0
  %244 = vmatpush.msra.mxu0 0.0
  %245 = vmatpush.msra.mxu0 0.0
  %246 = vmatpush.msra.mxu0 0.0
  %247 = vmatpush.msra.mxu0 0.0
  %248 = vmatpush.msra.mxu0 0.0
  %249 = vmatpush.msra.mxu0 0.0
  %250 = vmatpush.msra.mxu0 0.0
  %251 = vmatpush.msra.mxu0 %v37
  %252 = vmatpush.msra.mxu0 %v36
  %253 = vmatpush.msra.mxu0 %v35
  %254 = vmatpush.msra.mxu0 %v34
  %255 = vmatmul.f32.gmra.mxu0 %v237
  %v256 = vpop.f32.mrf.mxu0
  %v257 = vadd.f32 %v47, %v256
  %258 = vdwg.mxu0
  %v259 = vmul.f32 %v257, 0.2
  %v260 = vmax.f32 %v257, %v259
  %v262 = vsel %vm54, %v260, 0
  %264 = vmatpush.msra.mxu0 0.0
  %265 = vmatpush.msra.mxu0 0.0
  %266 = vmatpush.msra.mxu0 0.0
  %267 = vmatpush.msra.mxu0 0.0
  %268 = vmatpush.msra.mxu0 0.0
  %269 = vmatpush.msra.mxu0 0.0
  %270 = vmatpush.msra.mxu0 0.0
  %271 = vmatpush.msra.mxu0 0.0
  %272 = vmatpush.msra.mxu0 0.0
  %273 = vmatpush.msra.mxu0 0.0
  %274 = vmatpush.msra.mxu0 0.0
  %275 = vmatpush.msra.mxu0 0.0
  %276 = vmatpush.msra.mxu0 %v42
  %277 = vmatpush.msra.mxu0 %v41
  %278 = vmatpush.msra.mxu0 %v40
  %279 = vmatpush.msra.mxu0 %v39
  %280 = vmatmul.f32.gmra.mxu0 %v262
  %v281 = vpop.f32.mrf.mxu0
  %v282 = vadd.f32 %v80, %v281
  %283 = vdwg.mxu0
  %v284 = vmul.f32 %v282, 0.2
  %v285 = vmax.f32 %v282, %v284
  %287 = vrot.lane.b32.xlu0 %v285, 48
  %v288 = vpop.permute.xlu0 %287
  %vm290 = vcmask 517504
  %291 = vst.msk [vmem:[#allocation2] sm:$0x3] %vm290, %v288
  %v292 = vld [vmem:[%s0 + $0x4] sm:$0x1]
  %v293 = vld [vmem:[%s0 + $0xc] sm:$0x1]
  %v296 = vrot.slane %v293, 7
  %v297 = vsel %vm52, %v296, %v292
  %v298 = vsel %vm54, %v297, 0
  %300 = vmatpush.msra.mxu0 0.0
  %301 = vmatpush.msra.mxu0 0.0
  %302 = vmatpush.msra.mxu0 0.0
  %303 = vmatpush.msra.mxu0 0.0
  %304 = vmatpush.msra.mxu0 0.0
  %305 = vmatpush.msra.mxu0 0.0
  %306 = vmatpush.msra.mxu0 0.0
  %307 = vmatpush.msra.mxu0 0.0
  %308 = vmatpush.msra.mxu0 0.0
  %309 = vmatpush.msra.mxu0 0.0
  %310 = vmatpush.msra.mxu0 0.0
  %311 = vmatpush.msra.mxu0 0.0
  %312 = vmatpush.msra.mxu0 %v37
  %313 = vmatpush.msra.mxu0 %v36
  %314 = vmatpush.msra.mxu0 %v35
  %315 = vmatpush.msra.mxu0 %v34
  %316 = vmatmul.f32.gmra.mxu0 %v298
  %v317 = vpop.f32.mrf.mxu0
  %v318 = vadd.f32 %v47, %v317
  %319 = vdwg.mxu0
  %v320 = vmul.f32 %v318, 0.2
  %v321 = vmax.f32 %v318, %v320
  %v323 = vsel %vm54, %v321, 0
  %325 = vmatpush.msra.mxu0 0.0
  %326 = vmatpush.msra.mxu0 0.0
  %327 = vmatpush.msra.mxu0 0.0
  %328 = vmatpush.msra.mxu0 0.0
  %329 = vmatpush.msra.mxu0 0.0
  %330 = vmatpush.msra.mxu0 0.0
  %331 = vmatpush.msra.mxu0 0.0
  %332 = vmatpush.msra.mxu0 0.0
  %333 = vmatpush.msra.mxu0 0.0
  %334 = vmatpush.msra.mxu0 0.0
  %335 = vmatpush.msra.mxu0 0.0
  %336 = vmatpush.msra.mxu0 0.0
  %337 = vmatpush.msra.mxu0 %v42
  %338 = vmatpush.msra.mxu0 %v41
  %339 = vmatpush.msra.mxu0 %v40
  %340 = vmatpush.msra.mxu0 %v39
  %341 = vmatmul.f32.gmra.mxu0 %v323
  %v342 = vpop.f32.mrf.mxu0
  %v343 = vadd.f32 %v80, %v342
  %344 = vdwg.mxu0
  %v345 = vmul.f32 %v343, 0.2
  %v346 = vmax.f32 %v343, %v345
  %348 = vrot.lane.b32.xlu0 %v346, 64
  %v349 = vpop.permute.xlu0 %348
  %vm351 = vcmask 648704
  %352 = vst.msk [vmem:[#allocation2] sm:$0x3] %vm351, %v349
  %v353 = vld [vmem:[%s0 + $0x5] sm:$0x1]
  %v354 = vld [vmem:[%s0 + $0xd] sm:$0x1]
  %v357 = vrot.slane %v354, 7
  %v358 = vsel %vm52, %v357, %v353
  %v359 = vsel %vm54, %v358, 0
  %361 = vmatpush.msra.mxu0 0.0
  %362 = vmatpush.msra.mxu0 0.0
  %363 = vmatpush.msra.mxu0 0.0
  %364 = vmatpush.msra.mxu0 0.0
  %365 = vmatpush.msra.mxu0 0.0
  %366 = vmatpush.msra.mxu0 0.0
  %367 = vmatpush.msra.mxu0 0.0
  %368 = vmatpush.msra.mxu0 0.0
  %369 = vmatpush.msra.mxu0 0.0
  %370 = vmatpush.msra.mxu0 0.0
  %371 = vmatpush.msra.mxu0 0.0
  %372 = vmatpush.msra.mxu0 0.0
  %373 = vmatpush.msra.mxu0 %v37
  %374 = vmatpush.msra.mxu0 %v36
  %375 = vmatpush.msra.mxu0 %v35
  %376 = vmatpush.msra.mxu0 %v34
  %377 = vmatmul.f32.gmra.mxu0 %v359
  %v378 = vpop.f32.mrf.mxu0
  %v379 = vadd.f32 %v47, %v378
  %380 = vdwg.mxu0
  %v381 = vmul.f32 %v379, 0.2
  %v382 = vmax.f32 %v379, %v381
  %v384 = vsel %vm54, %v382, 0
  %386 = vmatpush.msra.mxu0 0.0
  %387 = vmatpush.msra.mxu0 0.0
  %388 = vmatpush.msra.mxu0 0.0
  %389 = vmatpush.msra.mxu0 0.0
  %390 = vmatpush.msra.mxu0 0.0
  %391 = vmatpush.msra.mxu0 0.0
  %392 = vmatpush.msra.mxu0 0.0
  %393 = vmatpush.msra.mxu0 0.0
  %394 = vmatpush.msra.mxu0 0.0
  %395 = vmatpush.msra.mxu0 0.0
  %396 = vmatpush.msra.mxu0 0.0
  %397 = vmatpush.msra.mxu0 0.0
  %398 = vmatpush.msra.mxu0 %v42
  %399 = vmatpush.msra.mxu0 %v41
  %400 = vmatpush.msra.mxu0 %v40
  %401 = vmatpush.msra.mxu0 %v39
  %402 = vmatmul.f32.gmra.mxu0 %v384
  %v403 = vpop.f32.mrf.mxu0
  %v404 = vadd.f32 %v80, %v403
  %405 = vdwg.mxu0
  %v406 = vmul.f32 %v404, 0.2
  %v407 = vmax.f32 %v404, %v406
  %409 = vrot.lane.b32.xlu0 %v407, 80
  %v410 = vpop.permute.xlu0 %409
  %vm412 = vcmask 779904
  %413 = vst.msk [vmem:[#allocation2] sm:$0x3] %vm412, %v410
  %v414 = vld [vmem:[%s0 + $0x6] sm:$0x1]
  %v415 = vld [vmem:[%s0 + $0xe] sm:$0x1]
  %v418 = vrot.slane %v415, 7
  %v419 = vsel %vm52, %v418, %v414
  %v420 = vsel %vm54, %v419, 0
  %422 = vmatpush.msra.mxu0 0.0
  %423 = vmatpush.msra.mxu0 0.0
  %424 = vmatpush.msra.mxu0 0.0
  %425 = vmatpush.msra.mxu0 0.0
  %426 = vmatpush.msra.mxu0 0.0
  %427 = vmatpush.msra.mxu0 0.0
  %428 = vmatpush.msra.mxu0 0.0
  %429 = vmatpush.msra.mxu0 0.0
  %430 = vmatpush.msra.mxu0 0.0
  %431 = vmatpush.msra.mxu0 0.0
  %432 = vmatpush.msra.mxu0 0.0
  %433 = vmatpush.msra.mxu0 0.0
  %434 = vmatpush.msra.mxu0 %v37
  %435 = vmatpush.msra.mxu0 %v36
  %436 = vmatpush.msra.mxu0 %v35
  %437 = vmatpush.msra.mxu0 %v34
  %438 = vmatmul.f32.gmra.mxu0 %v420
  %v439 = vpop.f32.mrf.mxu0
  %v440 = vadd.f32 %v47, %v439
  %441 = vdwg.mxu0
  %v442 = vmul.f32 %v440, 0.2
  %v443 = vmax.f32 %v440, %v442
  %v445 = vsel %vm54, %v443, 0
  %447 = vmatpush.msra.mxu0 0.0
  %448 = vmatpush.msra.mxu0 0.0
  %449 = vmatpush.msra.mxu0 0.0
  %450 = vmatpush.msra.mxu0 0.0
  %451 = vmatpush.msra.mxu0 0.0
  %452 = vmatpush.msra.mxu0 0.0
  %453 = vmatpush.msra.mxu0 0.0
  %454 = vmatpush.msra.mxu0 0.0
  %455 = vmatpush.msra.mxu0 0.0
  %456 = vmatpush.msra.mxu0 0.0
  %457 = vmatpush.msra.mxu0 0.0
  %458 = vmatpush.msra.mxu0 0.0
  %459 = vmatpush.msra.mxu0 %v42
  %460 = vmatpush.msra.mxu0 %v41
  %461 = vmatpush.msra.mxu0 %v40
  %462 = vmatpush.msra.mxu0 %v39
  %463 = vmatmul.f32.gmra.mxu0 %v445
  %v464 = vpop.f32.mrf.mxu0
  %v465 = vadd.f32 %v80, %v464
  %466 = vdwg.mxu0
  %v467 = vmul.f32 %v465, 0.2
  %v468 = vmax.f32 %v465, %v467
  %470 = vrot.lane.b32.xlu0 %v468, 96
  %v471 = vpop.permute.xlu0 %470
  %vm473 = vcmask 911104
  %474 = vst.msk [vmem:[#allocation2] sm:$0x3] %vm473, %v471
  %v475 = vld [vmem:[%s0 + $0x7] sm:$0x1]
  %v476 = vld [vmem:[%s0 + $0xf] sm:$0x1]
  %v479 = vrot.slane %v476, 7
  %v480 = vsel %vm52, %v479, %v475
  %v481 = vsel %vm54, %v480, 0
  %483 = vmatpush.msra.mxu0 0.0
  %484 = vmatpush.msra.mxu0 0.0
  %485 = vmatpush.msra.mxu0 0.0
  %486 = vmatpush.msra.mxu0 0.0
  %487 = vmatpush.msra.mxu0 0.0
  %488 = vmatpush.msra.mxu0 0.0
  %489 = vmatpush.msra.mxu0 0.0
  %490 = vmatpush.msra.mxu0 0.0
  %491 = vmatpush.msra.mxu0 0.0
  %492 = vmatpush.msra.mxu0 0.0
  %493 = vmatpush.msra.mxu0 0.0
  %494 = vmatpush.msra.mxu0 0.0
  %495 = vmatpush.msra.mxu0 %v37
  %496 = vmatpush.msra.mxu0 %v36
  %497 = vmatpush.msra.mxu0 %v35
  %498 = vmatpush.msra.mxu0 %v34
  %499 = vmatmul.f32.gmra.mxu0 %v481
  %v500 = vpop.f32.mrf.mxu0
  %v501 = vadd.f32 %v47, %v500
  %502 = vdwg.mxu0
  %v503 = vmul.f32 %v501, 0.2
  %v504 = vmax.f32 %v501, %v503
  %v506 = vsel %vm54, %v504, 0
  %508 = vmatpush.msra.mxu0 0.0
  %509 = vmatpush.msra.mxu0 0.0
  %510 = vmatpush.msra.mxu0 0.0
  %511 = vmatpush.msra.mxu0 0.0
  %512 = vmatpush.msra.mxu0 0.0
  %513 = vmatpush.msra.mxu0 0.0
  %514 = vmatpush.msra.mxu0 0.0
  %515 = vmatpush.msra.mxu0 0.0
  %516 = vmatpush.msra.mxu0 0.0
  %517 = vmatpush.msra.mxu0 0.0
  %518 = vmatpush.msra.mxu0 0.0
  %519 = vmatpush.msra.mxu0 0.0
  %520 = vmatpush.msra.mxu0 %v42
  %521 = vmatpush.msra.mxu0 %v41
  %522 = vmatpush.msra.mxu0 %v40
  %523 = vmatpush.msra.mxu0 %v39
  %524 = vmatmul.f32.gmra.mxu0 %v506
  %v525 = vpop.f32.mrf.mxu0
  %v526 = vadd.f32 %v80, %v525
  %527 = vdwg.mxu0
  %v528 = vmul.f32 %v526, 0.2
  %v529 = vmax.f32 %v526, %v528
  %531 = vrot.lane.b32.xlu0 %v529, 112
  %v532 = vpop.permute.xlu0 %531
  %vm534 = vcmask 1042304
  %535 = vst.msk [vmem:[#allocation2] sm:$0x3] %vm534, %v532
  %v536 = vld [vmem:[#allocation2] sm:$0x3]
  %v537 = vld [vmem:[%s5] sm:$0xff]
  %v538 = vld [vmem:[%s5 + $0x8] sm:$0xff]
  %v539 = vld [vmem:[%s5 + $0x10] sm:$0xff]
  %v540 = vld [vmem:[%s5 + $0x18] sm:$0xff]
  %v541 = vld [vmem:[%s5 + $0x20] sm:$0xff]
  %v542 = vld [vmem:[%s5 + $0x28] sm:$0xff]
  %v543 = vld [vmem:[%s5 + $0x30] sm:$0xff]
  %v544 = vld [vmem:[%s5 + $0x38] sm:$0xff]
  %v545 = vld [vmem:[%s5 + $0x40] sm:$0xff]
  %v546 = vld [vmem:[%s5 + $0x48] sm:$0xff]
  %v547 = vld [vmem:[%s5 + $0x50] sm:$0xff]
  %v548 = vld [vmem:[%s5 + $0x58] sm:$0xff]
  %v549 = vld [vmem:[%s5 + $0x60] sm:$0xff]
  %v550 = vld [vmem:[%s5 + $0x68] sm:$0xff]
  %v551 = vld [vmem:[%s5 + $0x70] sm:$0xff]
  %v552 = vld [vmem:[%s5 + $0x78] sm:$0xff]
  %v553 = vld [vmem:[%s6] sm:$0x1]
  %v555 = vperm.slane %v553, 0
  %557 = vmatpush.msra.mxu0 %v552
  %558 = vmatpush.msra.mxu0 %v551
  %559 = vmatpush.msra.mxu0 %v550
  %560 = vmatpush.msra.mxu0 %v549
  %561 = vmatpush.msra.mxu0 %v548
  %562 = vmatpush.msra.mxu0 %v547
  %563 = vmatpush.msra.mxu0 %v546
  %564 = vmatpush.msra.mxu0 %v545
  %565 = vmatpush.msra.mxu0 %v544
  %566 = vmatpush.msra.mxu0 %v543
  %567 = vmatpush.msra.mxu0 %v542
  %568 = vmatpush.msra.mxu0 %v541
  %569 = vmatpush.msra.mxu0 %v540
  %570 = vmatpush.msra.mxu0 %v539
  %571 = vmatpush.msra.mxu0 %v538
  %572 = vmatpush.msra.mxu0 %v537
  %573 = vmatmul.f32.gmra.mxu0 %v536
  %v574 = vpop.f32.mrf.mxu0
  %v575 = vadd.f32 %v555, %v574
  %576 = vdwg.mxu0
  %v577 = vmul.f32 %v575, 0.2
  %v578 = vmax.f32 %v575, %v577
  %v579 = vld [vmem:[%s7] sm:$0x1]
  %v581 = vperm.slane %v579, 0
  %v583 = vmul.f32 %v578, %v581
  %vm584 = vcmask 254976
  %v585 = vsel %vm584, %v583, 0.0
  %586 = vadd.xlane.f32.xlu0 %v585
  %v587 = vpop.xlane.xlu0 %586
  %v588 = vld [vmem:[#allocation3] sm:$0x1]
  %v590 = vperm.slane %v588, 0
  %v592 = vadd.f32 %v587, %v590
  %v593 = vxor.u32 %v592, 2147483648
  %v594 = vmul.f32 %v593, 1.442695
  %v595 = vpow.pop %v594
  %v596 = vadd.f32 %v595, 1.0
  %v597 = vrcp.pop %v596
  %v598 = vmul.f32 %v596, %v597
  %v599 = vsub.f32 1.0, %v598
  %v600 = vmul.f32 %v597, %v599
  %v601 = vadd.f32 %v597, %v600
  %vm602 = vweird.f32 %v596
  %vm603 = vweird.f32 %v597
  %vm604 = vmor %vm602, %vm603
  %v605 = vsel %vm604, %v597, %v601
  %v606 = vand.u32 2147483647, %v596
  %vm607 = vcmp.eq.f32.partialorder %v606, 8.507059e+37
  %v608 = vand.u32 %v596, 2147483648
  %v609 = vor.u32 1.1754944e-38, %v608
  %v610 = vsel %vm607, %v609, %v605
  %v611 = vmul.f32 1.0, %v610
  %vm612 = vcmask 1024
  %613 = vst.msk [vmem:[%s9] sm:$0x3] %vm612, %v611
  // Predicated region
  $region38: #{_lambda_.1} parent=0 // pred_check
    _
  $region39: #{_lambda_.1} parent=0 // pred_check_branch
    %615 = sbr.rel (0) target = $region41
  $region40: #{_lambda_.1} parent=0 // pred_region
    _
  $region41: #{_lambda_.1} parent=0 // pred_fallthru
    _
  // Predicated region
  $region42: #{_lambda_.1} parent=0 // pred_check
    _
  $region43: #{_lambda_.1} parent=0 // pred_check_branch
    %617 = sbr.rel (0) target = $region45
  $region44: #{_lambda_.1} parent=0 // pred_region
    _
  $region45: #{_lambda_.1} parent=0 // pred_fallthru
    _

</llo_original>
